<compile_context>
chip_gen: v6e
topology: v6e:2x2x1
jax: 0.10.0
libtpu: 0.0.40
codegen_flags: <defaults>
</compile_context>

<pallas_src>
import jax
import jax.numpy as jnp
from jax.experimental import pallas as pl
from jax.experimental.pallas import tpu as pltpu


def _round_up(x, m):
    return ((x + m - 1) // m) * m


def hetero_node_cls_pooler(x, batch, num_graphs, weight_t_bf16, bias,
                           index_selector=1, tm=128):
    """Fused to_dense_batch(x, batch)[0][:, index_selector] + Linear(H, H).

    x            : [N, H] f32 node features; graphs contiguous, `batch` sorted ascending
                   (PyG's to_dense_batch contract).
    batch        : [N] int32 graph id per node.
    num_graphs   : static Python int B.
    weight_t_bf16: [H, H] bf16 Linear weight, PRE-TRANSPOSED to [in, out] once at init.
    bias         : [H] f32.
    """
    N, H = x.shape
    B = int(num_graphs)

    # Batch tiling: TM rows per grid step (multiple of 8 sublanes, capped at `tm`).
    TM = min(_round_up(B, 8), _round_up(tm, 8))
    G = -(-B // TM)                       # number of grid steps
    B_pad = G * TM
    tail = B - (G - 1) * TM               # valid rows in the last block, in (0, TM]
    full_tail = (tail == TM)

    # Graph start offsets via searchsorted on the sorted batch vector (no scatter-add/cumsum).
    gids = jnp.arange(B, dtype=batch.dtype)
    ptr = jnp.searchsorted(batch, gids, side="left").astype(jnp.int32)       # [B]
    ends = jnp.concatenate([ptr[1:], jnp.array([N], jnp.int32)])
    counts = ends - ptr
    sel = jnp.clip(ptr + index_selector, 0, N - 1)                           # row to gather / graph
    valid = (index_selector < counts).astype(jnp.float32)                    # to_dense_batch padding

    mask_pad = jnp.pad(valid, (0, B_pad - B))[:, None]                       # [B_pad, 1] f32

    def kernel(sel_ref, x_hbm, w_ref, b_ref, mask_ref, o_ref, rows, sems):
        g = pl.program_id(0)
        slot = g & 1

        # ---- manual gather machinery ------------------------------------------------
        def issue_rows(j, dst_slot, lo, hi):
            base = j * TM
            for i in range(lo, hi):
                pltpu.make_async_copy(
                    x_hbm.at[pl.ds(sel_ref[base + i], 1), :],
                    rows.at[dst_slot, pl.ds(i, 1), :],
                    sems.at[dst_slot],
                ).start()

        def issue_block(j, dst_slot):
            # Rows [0, tail) exist in every block; rows [tail, TM) only in non-last blocks.
            issue_rows(j, dst_slot, 0, tail)
            if (not full_tail) and G > 1:
                pl.when(j < G - 1)(lambda: issue_rows(j, dst_slot, tail, TM))
            # (G == 1, i >= tail): statically skipped -> zeroed by the jnp.where select below.

        def wait_rows(dst_slot, n):
            # Constant-source/dest wait descriptors: the wait only needs the semaphore and the
            # byte count, so no sel_ref SMEM reads are interleaved with the waits.
            for _ in range(n):
                pltpu.make_async_copy(
                    x_hbm.at[pl.ds(0, 1), :],
                    rows.at[dst_slot, pl.ds(0, 1), :],
                    sems.at[dst_slot],
                ).wait()

        def wait_block(j, dst_slot):
            wait_rows(dst_slot, tail)
            if (not full_tail) and G > 1:
                pl.when(j < G - 1)(lambda: wait_rows(dst_slot, TM - tail))

        # ---- gather pipeline ----------------------------------------------------------
        if G == 1:
            issue_block(g, slot)                   # single step: gather own block
        else:
            @pl.when(g == 0)
            def _():                               # prologue: nothing was prefetched for step 0
                issue_block(g, slot)

            @pl.when(g + 1 < G)
            def _():                               # prefetch next block into the other slot;
                issue_block(g + 1, 1 - slot)       # overlaps with this block's wait + matmul

        wait_block(g, slot)

        # ---- compute -------------------------------------------------------------------
        # to_dense_batch zero-padding (and padded batch slots) via select, f32 on the VPU.
        pooled = jnp.where(mask_ref[...] != 0.0, rows[slot], 0.0)
        # pooled @ W^T on the MXU: bf16 operands (weight pre-transposed [in, out] at init),
        # f32 accumulation.
        acc = jnp.dot(pooled.astype(jnp.bfloat16), w_ref[...],
                      preferred_element_type=jnp.float32)
        o_ref[...] = (acc + b_ref[...]).astype(o_ref.dtype)

    grid_spec = pltpu.PrefetchScalarGridSpec(
        num_scalar_prefetch=1,                              # sel -> SMEM, drives the gather DMAs
        grid=(G,),
        in_specs=[
            pl.BlockSpec(memory_space=pl.ANY),              # x stays in HBM; rows DMA'd manually
            pl.BlockSpec((H, H), lambda g, sel: (0, 0)),    # W^T bf16, resident across steps
            pl.BlockSpec((1, H), lambda g, sel: (0, 0)),    # bias
            pl.BlockSpec((TM, 1), lambda g, sel: (g, 0)),   # validity mask block
        ],
        out_specs=pl.BlockSpec((TM, H), lambda g, sel: (g, 0)),
        scratch_shapes=[
            pltpu.VMEM((2, TM, H), x.dtype),                # double-buffered gathered rows
            pltpu.SemaphoreType.DMA((2,)),                  # one DMA semaphore per slot
        ],
    )

    out = pl.pallas_call(
        kernel,
        out_shape=jax.ShapeDtypeStruct((B_pad, H), jnp.float32),
        grid_spec=grid_spec,
        # "arbitrary": the cross-step DMA prefetch carries state between grid steps.
        # TODO(synk): on v7x (2 TCs) a core-parallel split of the batch axis needs the
        # cross-step prefetch dropped/restructured per core; plain "parallel" vs "arbitrary"
        # has no measured codegen impact on v5e/v6e.
        compiler_params=pltpu.CompilerParams(dimension_semantics=("arbitrary",)),
        # TODO(synk): for H >= ~2k, single-buffer the weight (pipeline_mode=pl.Buffered(1)) or
        # tile its in/out dims with a real grid and set vmem_limit_bytes so the resident bf16
        # weight fits v7x's 64 MiB VMEM; also consider bf16 node features to halve gather bytes.
    )(sel, x, weight_t_bf16, bias.reshape(1, H), mask_pad)
    return out[:B]


def _reference(x, batch, num_graphs, weight_f32, bias, index_selector):
    """Pure-JAX mirror of the PyTorch module (f32 Linear)."""
    N = x.shape[0]
    counts = jnp.zeros((num_graphs,), jnp.int32).at[batch].add(1)
    ptr = jnp.concatenate([jnp.zeros((1,), jnp.int32),
                           jnp.cumsum(counts)[:-1].astype(jnp.int32)])
    sel = jnp.clip(ptr + index_selector, 0, N - 1)
    valid = index_selector < counts
    pooled = jnp.where(valid[:, None], x[sel], 0.0)
    return pooled, pooled @ weight_f32.T + bias


if __name__ == "__main__":
    key = jax.random.PRNGKey(0)
    kx1, kx2, kw, kb = jax.random.split(key, 4)

    hidden_channels = 128
    index_selector = 1

    # Deterministic Linear(hidden, hidden) init (PyTorch-style uniform bounds).
    bound = 1.0 / (hidden_channels ** 0.5)
    weight = jax.random.uniform(kw, (hidden_channels, hidden_channels),
                                minval=-bound, maxval=bound, dtype=jnp.float32)
    bias = jax.random.uniform(kb, (hidden_channels,),
                              minval=-bound, maxval=bound, dtype=jnp.float32)
    # One-time stored-parameter prep (not per call): transpose to [in, out] and cast to bf16.
    weight_t_bf16 = weight.T.astype(jnp.bfloat16)

    def run_case(key_x, node_counts, tm):
        num_graphs = len(node_counts)
        N = sum(node_counts)
        x = jax.random.normal(key_x, (N, hidden_channels), dtype=jnp.float32)
        batch = jnp.repeat(jnp.arange(num_graphs, dtype=jnp.int32),
                           jnp.array(node_counts))

        out = hetero_node_cls_pooler(x, batch, num_graphs, weight_t_bf16, bias,
                                     index_selector=index_selector, tm=tm)
        out = jax.block_until_ready(out)

        pooled_ref, ref_f32 = _reference(x, batch, num_graphs, weight, bias, index_selector)
        # (a) tight check against the same bf16-operand / f32-accumulate math the kernel runs
        ref_bf16 = (pooled_ref.astype(jnp.bfloat16).astype(jnp.float32)
                    @ weight_t_bf16.astype(jnp.float32) + bias)

        assert out.shape == (num_graphs, hidden_channels)
        assert jnp.allclose(out, ref_bf16, atol=2e-3, rtol=2e-3), \
            float(jnp.max(jnp.abs(out - ref_bf16)))
        # (b) loose semantic check against the full-f32 PyTorch Linear
        assert jnp.allclose(out, ref_f32, atol=5e-2, rtol=5e-2), \
            float(jnp.max(jnp.abs(out - ref_f32)))

    # Case 1: shipped small shape (B=3 -> single grid step; graph 1 has only one node, so its
    # pooled row is zero-padded and its output must equal the bias).
    run_case(kx1, [3, 1, 4], tm=128)

    # Case 2: multi-block path (B=20, TM=8 -> 3 grid steps, padded tail) exercising the
    # double-buffered gather pipeline, the skip-padded-DMA path and the validity mask.
    run_case(kx2, [3, 1, 4, 2, 1, 5, 2, 3, 1, 4, 2, 2, 3, 1, 6, 2, 4, 1, 3, 2], tm=8)

    print("KERNEL_OK")
</pallas_src>

<mosaic_0001>
module attributes {stable_mosaic.version = 11 : i64} {
  func.func @kernel(%arg0: i32, %arg1: memref<3xi32, #tpu.memory_space<smem>>, %arg2: memref<8x128xf32, #tpu.memory_space<any>>, %arg3: memref<128x128xbf16, #tpu.memory_space<vmem>>, %arg4: memref<1x128xf32, #tpu.memory_space<vmem>>, %arg5: memref<8x1xf32, #tpu.memory_space<vmem>>, %arg6: memref<8x128xf32, #tpu.memory_space<vmem>>, %arg7: memref<2x8x128xf32, #tpu.memory_space<vmem>>, %arg8: memref<2x!tpu.dma_semaphore, #tpu.memory_space<semaphore_mem>>) attributes {dimension_semantics = [#tpu.dimension_semantics<arbitrary>], iteration_bounds = array<i64: 1>, scalar_prefetch = 1 : i64, scratch_operands = 2 : i64, tpu.core_type = #tpu.core_type<tc>, window_params = [{}, {pipeline_mode = #tpu.pipeline_mode<synchronous>, transform_indices = @transform_1, window_bounds = array<i64: 128, 128>}, {pipeline_mode = #tpu.pipeline_mode<synchronous>, transform_indices = @transform_2, window_bounds = array<i64: 1, 128>}, {transform_indices = @transform_3, window_bounds = array<i64: 8, 1>}, {transform_indices = @transform_4, window_bounds = array<i64: 8, 128>}]} {
    %c1_i32 = arith.constant 1 : i32
    %0 = arith.andi %arg0, %c1_i32 : i32
    %c8_i32 = arith.constant 8 : i32
    %1 = arith.muli %arg0, %c8_i32 : i32
    %c0_i32 = arith.constant 0 : i32
    %2 = arith.addi %1, %c0_i32 : i32
    %3 = arith.index_cast %2 : i32 to index
    %4 = memref.load %arg1[%3] : memref<3xi32, #tpu.memory_space<smem>>
    %c0_i32_0 = arith.constant 0 : i32
    %5 = tpu.memref_slice %arg2[%4, %c0_i32_0] : memref<8x128xf32, #tpu.memory_space<any>> -> memref<1x128xf32, #tpu.memory_space<any>>
    %c0_i32_1 = arith.constant 0 : i32
    %c0_i32_2 = arith.constant 0 : i32
    %6 = tpu.memref_slice %arg7[%0, %c0_i32_1, %c0_i32_2] : memref<2x8x128xf32, #tpu.memory_space<vmem>> -> memref<1x1x128xf32, #tpu.memory_space<vmem>>
    %7 = tpu.memref_squeeze %6 : memref<1x1x128xf32, #tpu.memory_space<vmem>> -> memref<1x128xf32, #tpu.memory_space<vmem>>
    %8 = tpu.memref_slice %arg8[%0] : memref<2x!tpu.dma_semaphore, #tpu.memory_space<semaphore_mem>> -> memref<1x!tpu.dma_semaphore, #tpu.memory_space<semaphore_mem>>
    %9 = tpu.memref_squeeze %8 : memref<1x!tpu.dma_semaphore, #tpu.memory_space<semaphore_mem>> -> memref<!tpu.dma_semaphore, #tpu.memory_space<semaphore_mem>>
    tpu.enqueue_dma source(%5 : memref<1x128xf32, #tpu.memory_space<any>>) target(%7 : memref<1x128xf32, #tpu.memory_space<vmem>>) target_semaphore(%9 : memref<!tpu.dma_semaphore, #tpu.memory_space<semaphore_mem>>)
    %c1_i32_3 = arith.constant 1 : i32
    %10 = arith.addi %1, %c1_i32_3 : i32
    %11 = arith.index_cast %10 : i32 to index
    %12 = memref.load %arg1[%11] : memref<3xi32, #tpu.memory_space<smem>>
    %c0_i32_4 = arith.constant 0 : i32
    %13 = tpu.memref_slice %arg2[%12, %c0_i32_4] : memref<8x128xf32, #tpu.memory_space<any>> -> memref<1x128xf32, #tpu.memory_space<any>>
    %c1_i32_5 = arith.constant 1 : i32
    %c0_i32_6 = arith.constant 0 : i32
    %14 = tpu.memref_slice %arg7[%0, %c1_i32_5, %c0_i32_6] : memref<2x8x128xf32, #tpu.memory_space<vmem>> -> memref<1x1x128xf32, #tpu.memory_space<vmem>>
    %15 = tpu.memref_squeeze %14 : memref<1x1x128xf32, #tpu.memory_space<vmem>> -> memref<1x128xf32, #tpu.memory_space<vmem>>
    %16 = tpu.memref_slice %arg8[%0] : memref<2x!tpu.dma_semaphore, #tpu.memory_space<semaphore_mem>> -> memref<1x!tpu.dma_semaphore, #tpu.memory_space<semaphore_mem>>
    %17 = tpu.memref_squeeze %16 : memref<1x!tpu.dma_semaphore, #tpu.memory_space<semaphore_mem>> -> memref<!tpu.dma_semaphore, #tpu.memory_space<semaphore_mem>>
    tpu.enqueue_dma source(%13 : memref<1x128xf32, #tpu.memory_space<any>>) target(%15 : memref<1x128xf32, #tpu.memory_space<vmem>>) target_semaphore(%17 : memref<!tpu.dma_semaphore, #tpu.memory_space<semaphore_mem>>)
    %c2_i32 = arith.constant 2 : i32
    %18 = arith.addi %1, %c2_i32 : i32
    %19 = arith.index_cast %18 : i32 to index
    %20 = memref.load %arg1[%19] : memref<3xi32, #tpu.memory_space<smem>>
    %c0_i32_7 = arith.constant 0 : i32
    %21 = tpu.memref_slice %arg2[%20, %c0_i32_7] : memref<8x128xf32, #tpu.memory_space<any>> -> memref<1x128xf32, #tpu.memory_space<any>>
    %c2_i32_8 = arith.constant 2 : i32
    %c0_i32_9 = arith.constant 0 : i32
    %22 = tpu.memref_slice %arg7[%0, %c2_i32_8, %c0_i32_9] : memref<2x8x128xf32, #tpu.memory_space<vmem>> -> memref<1x1x128xf32, #tpu.memory_space<vmem>>
    %23 = tpu.memref_squeeze %22 : memref<1x1x128xf32, #tpu.memory_space<vmem>> -> memref<1x128xf32, #tpu.memory_space<vmem>>
    %24 = tpu.memref_slice %arg8[%0] : memref<2x!tpu.dma_semaphore, #tpu.memory_space<semaphore_mem>> -> memref<1x!tpu.dma_semaphore, #tpu.memory_space<semaphore_mem>>
    %25 = tpu.memref_squeeze %24 : memref<1x!tpu.dma_semaphore, #tpu.memory_space<semaphore_mem>> -> memref<!tpu.dma_semaphore, #tpu.memory_space<semaphore_mem>>
    tpu.enqueue_dma source(%21 : memref<1x128xf32, #tpu.memory_space<any>>) target(%23 : memref<1x128xf32, #tpu.memory_space<vmem>>) target_semaphore(%25 : memref<!tpu.dma_semaphore, #tpu.memory_space<semaphore_mem>>)
    %c0_i32_10 = arith.constant 0 : i32
    %c0_i32_11 = arith.constant 0 : i32
    %26 = tpu.memref_slice %arg2[%c0_i32_10, %c0_i32_11] : memref<8x128xf32, #tpu.memory_space<any>> -> memref<1x128xf32, #tpu.memory_space<any>>
    %c0_i32_12 = arith.constant 0 : i32
    %c0_i32_13 = arith.constant 0 : i32
    %27 = tpu.memref_slice %arg7[%0, %c0_i32_12, %c0_i32_13] : memref<2x8x128xf32, #tpu.memory_space<vmem>> -> memref<1x1x128xf32, #tpu.memory_space<vmem>>
    %28 = tpu.memref_squeeze %27 : memref<1x1x128xf32, #tpu.memory_space<vmem>> -> memref<1x128xf32, #tpu.memory_space<vmem>>
    %29 = tpu.memref_slice %arg8[%0] : memref<2x!tpu.dma_semaphore, #tpu.memory_space<semaphore_mem>> -> memref<1x!tpu.dma_semaphore, #tpu.memory_space<semaphore_mem>>
    %30 = tpu.memref_squeeze %29 : memref<1x!tpu.dma_semaphore, #tpu.memory_space<semaphore_mem>> -> memref<!tpu.dma_semaphore, #tpu.memory_space<semaphore_mem>>
    tpu.wait_dma2 semaphore(%30 : memref<!tpu.dma_semaphore, #tpu.memory_space<semaphore_mem>>) src(%26 : memref<1x128xf32, #tpu.memory_space<any>>) dst(%28 : memref<1x128xf32, #tpu.memory_space<vmem>>)
    %c0_i32_14 = arith.constant 0 : i32
    %c0_i32_15 = arith.constant 0 : i32
    %31 = tpu.memref_slice %arg2[%c0_i32_14, %c0_i32_15] : memref<8x128xf32, #tpu.memory_space<any>> -> memref<1x128xf32, #tpu.memory_space<any>>
    %c0_i32_16 = arith.constant 0 : i32
    %c0_i32_17 = arith.constant 0 : i32
    %32 = tpu.memref_slice %arg7[%0, %c0_i32_16, %c0_i32_17] : memref<2x8x128xf32, #tpu.memory_space<vmem>> -> memref<1x1x128xf32, #tpu.memory_space<vmem>>
    %33 = tpu.memref_squeeze %32 : memref<1x1x128xf32, #tpu.memory_space<vmem>> -> memref<1x128xf32, #tpu.memory_space<vmem>>
    %34 = tpu.memref_slice %arg8[%0] : memref<2x!tpu.dma_semaphore, #tpu.memory_space<semaphore_mem>> -> memref<1x!tpu.dma_semaphore, #tpu.memory_space<semaphore_mem>>
    %35 = tpu.memref_squeeze %34 : memref<1x!tpu.dma_semaphore, #tpu.memory_space<semaphore_mem>> -> memref<!tpu.dma_semaphore, #tpu.memory_space<semaphore_mem>>
    tpu.wait_dma2 semaphore(%35 : memref<!tpu.dma_semaphore, #tpu.memory_space<semaphore_mem>>) src(%31 : memref<1x128xf32, #tpu.memory_space<any>>) dst(%33 : memref<1x128xf32, #tpu.memory_space<vmem>>)
    %c0_i32_18 = arith.constant 0 : i32
    %c0_i32_19 = arith.constant 0 : i32
    %36 = tpu.memref_slice %arg2[%c0_i32_18, %c0_i32_19] : memref<8x128xf32, #tpu.memory_space<any>> -> memref<1x128xf32, #tpu.memory_space<any>>
    %c0_i32_20 = arith.constant 0 : i32
    %c0_i32_21 = arith.constant 0 : i32
    %37 = tpu.memref_slice %arg7[%0, %c0_i32_20, %c0_i32_21] : memref<2x8x128xf32, #tpu.memory_space<vmem>> -> memref<1x1x128xf32, #tpu.memory_space<vmem>>
    %38 = tpu.memref_squeeze %37 : memref<1x1x128xf32, #tpu.memory_space<vmem>> -> memref<1x128xf32, #tpu.memory_space<vmem>>
    %39 = tpu.memref_slice %arg8[%0] : memref<2x!tpu.dma_semaphore, #tpu.memory_space<semaphore_mem>> -> memref<1x!tpu.dma_semaphore, #tpu.memory_space<semaphore_mem>>
    %40 = tpu.memref_squeeze %39 : memref<1x!tpu.dma_semaphore, #tpu.memory_space<semaphore_mem>> -> memref<!tpu.dma_semaphore, #tpu.memory_space<semaphore_mem>>
    tpu.wait_dma2 semaphore(%40 : memref<!tpu.dma_semaphore, #tpu.memory_space<semaphore_mem>>) src(%36 : memref<1x128xf32, #tpu.memory_space<any>>) dst(%38 : memref<1x128xf32, #tpu.memory_space<vmem>>)
    %c0 = arith.constant 0 : index
    %c0_22 = arith.constant 0 : index
    %41 = vector.load %arg5[%c0, %c0_22] : memref<8x1xf32, #tpu.memory_space<vmem>>, vector<8x1xf32>
    %cst = arith.constant 0.000000e+00 : f32
    %42 = vector.broadcast %cst : f32 to vector<8x1xf32>
    %43 = arith.cmpf one, %41, %42 : vector<8x1xf32>
    %44 = arith.index_cast %0 : i32 to index
    %c0_23 = arith.constant 0 : index
    %c0_24 = arith.constant 0 : index
    %45 = vector.load %arg7[%44, %c0_23, %c0_24] : memref<2x8x128xf32, #tpu.memory_space<vmem>>, vector<1x8x128xf32>
    %46 = vector.shape_cast %45 : vector<1x8x128xf32> to vector<8x128xf32>
    %cst_25 = arith.constant 0.000000e+00 : f32
    %47 = vector.shape_cast %43 : vector<8x1xi1> to vector<8x1xi1>
    %48 = vector.broadcast %47 : vector<8x1xi1> to vector<8x128xi1>
    %49 = vector.broadcast %cst_25 : f32 to vector<8x128xf32>
    %50 = arith.select %48, %46, %49 : vector<8x128xi1>, vector<8x128xf32>
    %51 = arith.truncf %50 : vector<8x128xf32> to vector<8x128xbf16>
    %c0_26 = arith.constant 0 : index
    %c0_27 = arith.constant 0 : index
    %52 = vector.load %arg3[%c0_26, %c0_27] : memref<128x128xbf16, #tpu.memory_space<vmem>>, vector<128x128xbf16>
    %cst_28 = arith.constant dense<0.000000e+00> : vector<8x128xf32>
    %53 = tpu.matmul %51, %52, %cst_28 {dimension_numbers = #tpu.dot_dimension_numbers<[1], [0], [0], [1], [0, 0, 1, 1], [], []>} : vector<8x128xbf16>, vector<128x128xbf16>, vector<8x128xf32> -> vector<8x128xf32>
    %c0_29 = arith.constant 0 : index
    %c0_30 = arith.constant 0 : index
    %54 = vector.load %arg4[%c0_29, %c0_30] : memref<1x128xf32, #tpu.memory_space<vmem>>, vector<1x128xf32>
    %55 = vector.broadcast %54 : vector<1x128xf32> to vector<8x128xf32>
    %56 = arith.addf %53, %55 : vector<8x128xf32>
    %c0_31 = arith.constant 0 : index
    %c0_32 = arith.constant 0 : index
    %57 = vector.load %arg6[%c0_31, %c0_32] : memref<8x128xf32, #tpu.memory_space<vmem>>, vector<8x128xf32>
    tpu.vector_store %arg6[%c0_31, %c0_32], %56 {strides = array<i32>} : memref<8x128xf32, #tpu.memory_space<vmem>>, vector<8x128xf32>,
    return
  }
  func.func @transform_1(%arg0: i32, %arg1: memref<3xi32, #tpu.memory_space<smem>>) -> (i32, i32) {
    %c0_i32 = arith.constant 0 : i32
    %c0_i32_0 = arith.constant 0 : i32
    %c0_i32_1 = arith.constant 0 : i32
    return %c0_i32, %c0_i32_0 : i32, i32
  }
  func.func @transform_2(%arg0: i32, %arg1: memref<3xi32, #tpu.memory_space<smem>>) -> (i32, i32) {
    %c0_i32 = arith.constant 0 : i32
    %c0_i32_0 = arith.constant 0 : i32
    %c0_i32_1 = arith.constant 0 : i32
    return %c0_i32, %c0_i32_0 : i32, i32
  }
  func.func @transform_3(%arg0: i32, %arg1: memref<3xi32, #tpu.memory_space<smem>>) -> (i32, i32) {
    %c0_i32 = arith.constant 0 : i32
    %c0_i32_0 = arith.constant 0 : i32
    return %arg0, %c0_i32 : i32, i32
  }
  func.func @transform_4(%arg0: i32, %arg1: memref<3xi32, #tpu.memory_space<smem>>) -> (i32, i32) {
    %c0_i32 = arith.constant 0 : i32
    %c0_i32_0 = arith.constant 0 : i32
    return %arg0, %c0_i32 : i32, i32
  }
}

</mosaic_0001>

<llo_original>
// kernel: tpu_custom_call.1
$region0: #{tpu_custom_call.1}
  #allocation0 [shape = 'u32[]', space=smem, size = 0x4, offset = 0x4, fixed_abs, tag = 'smem constant byte address 0x4 - core index']
  #allocation1 [shape = 'u32[144,128]{1,0:T(1,128)}', space=vmem, size = 0x12000, scoped, tag = 'internal scratch']
  #allocation2 [shape = 'f32[2,8,128]{2,1,0:T(8,128)}', space=vmem, size = 0x2000, scoped, tag = 'scratch operand']
  #allocation3 [shape = 's32[2]{0}', space=sflag, size = 0x8, scoped, tag = 'scratch operand']
  #allocation4 [shape = 's32[1]{0}', space=sflag, size = 0x4, scoped, tag = 'scoped memory for tpu_custom_call.1']
  #allocation5 [shape = 'u8[512]{0}', space=smem, size = 0x200, scoped, tag = 'prefetched SMEM operand 0']
  #allocation10 [shape = 's32[]', space=sflag, size = 0x4, offset = 0, fixed_abs, tag = 'sflag constant byte address 0x0 - dummy sync flag']
  #allocation11 [shape = 's32[]', space=sflag, size = 0x4, offset = 0, fixed_abs, tag = 'sflag constant byte address 0x0 - dummy sync flag']
  #allocation12 [shape = 's32[]', space=sflag, size = 0x4, offset = 0, fixed_abs, tag = 'sflag constant byte address 0x0 - dummy sync flag']
  %s0 = inlined_call_operand.vmem [shape: s32[3], index: 0, kind: input, shape index: {}]
  %s1 = inlined_call_operand.vmem [shape: f32[8,128], index: 1, kind: input, shape index: {}]
  %s2 = inlined_call_operand.hbm [shape: bf16[128,128], index: 2, kind: input, shape index: {}]
  %s3 = inlined_call_operand.vmem [shape: f32[1,128], index: 3, kind: input, shape index: {}]
  %s4 = inlined_call_operand.vmem [shape: f32[8,1], index: 4, kind: input, shape index: {}]
  %s5 = inlined_call_operand.hbm [shape: f32[8,128], index: 5, kind: output, shape index: {}]
  %s6 = sld [smem:[#allocation0]]
  $region116: #{tpu_custom_call.1} parent=0
    _
  %s8 = ssub.s32 1, %s6
  %s9 = scalar_select 0, %s8, %s6
  %s10 = sshll.u32 %s0, 4
  %s11 = int_to_ptr.vmem [resolvable:$true] %s10
  %13 = dma.vmem_to_smem %s11, 16, [#allocation5], [#allocation4]
  %14 = dma.done [#allocation4], 16
  %15 = sfence
  $region1: #{tpu_custom_call.1} parent=0
    #allocation6 [shape = 'u8[32768]{0}', space=vmem, size = 0x8000, scoped, tag = 'input window, operand 2, single buffered']
    #allocation7 [shape = 's32[1]{0}', space=sflag, size = 0x4, scoped, tag = 'scoped memory for tpu_custom_call.1']
    #allocation8 [shape = 's32[1]{0}', space=sflag, size = 0x4, scoped, tag = 'scoped memory for tpu_custom_call.1']
    #allocation9 [shape = 'u8[4096]{0}', space=vmem, size = 0x1000, scoped, tag = 'output window, operand 0, single buffered']
    %16 = vsyncpa [#allocation7], 0
    %17 = vsyncpa [#allocation8], 0
    // Predicated region
    $region2: #{tpu_custom_call.1} parent=1 // pred_check
      _
    $region3: #{tpu_custom_call.1} parent=1 // pred_check_branch
      %19 = sbr.rel (0) target = $region5
    $region4: #{tpu_custom_call.1} parent=1 // pred_region
      %s21 = ssub.s32 1024, 1024
      %22 = vsyncadd [#allocation7], %s21
      %s23 = sshll.u32 [#allocation6], 4
      %s24 = int_to_ptr.vmem [resolvable:$true] %s23
      %29 = dma.hbm_to_vmem [thread:$0]  %s2, 1024, %s24, [#allocation7], 64, 64, 4
    $region5: #{tpu_custom_call.1} parent=1 // pred_fallthru
      _
    // Predicated region
    $region6: #{tpu_custom_call.1} parent=1 // pred_check
      _
    $region7: #{tpu_custom_call.1} parent=1 // pred_check_branch
      %31 = sbr.rel (0) target = $region9
    $region8: #{tpu_custom_call.1} parent=1 // pred_region
      _
    $region9: #{tpu_custom_call.1} parent=1 // pred_fallthru
      _
    // Predicated region
    $region10: #{tpu_custom_call.1} parent=1 // pred_check
      _
    $region11: #{tpu_custom_call.1} parent=1 // pred_check_branch
      %33 = sbr.rel (0) target = $region13
    $region12: #{tpu_custom_call.1} parent=1 // pred_region
      _
    $region13: #{tpu_custom_call.1} parent=1 // pred_fallthru
      _
    // Predicated region
    $region14: #{tpu_custom_call.1} parent=1 // pred_check
      _
    $region15: #{tpu_custom_call.1} parent=1 // pred_check_branch
      %35 = sbr.rel (0) target = $region17
    $region16: #{tpu_custom_call.1} parent=1 // pred_region
      %36 = dma.done [#allocation7], 1024
    $region17: #{tpu_custom_call.1} parent=1 // pred_fallthru
      _
    %s38 = sand.u32 0, 1
    %s39 = smul.u32 0, 8
    %s40 = sld [smem:[#allocation5 + %s39]]
    %s41 = scalar_lea.vmem %s1, %s40
    %s42 = smul.u32 %s38, 8
    %s43 = scalar_lea.vmem [#allocation2], %s42
    %s44 = scalar_lea.sflag [#allocation3], %s38
    %p46 = scmp.lt.u32.totalorder 1, 8
    %p47 = pneg %p46
    // Predicated region
    $region18: #{tpu_custom_call.1} parent=1 // pred_check
      _
    $region19: #{tpu_custom_call.1} parent=1 // pred_check_branch
      %49 = sbr.rel (%p46) target = $region21
    $region20: #{tpu_custom_call.1} parent=1 // pred_region
      %s65 = sand.u32 1, 7
      %p66 = scmp.eq.s32.totalorder %s65, 0
      %p67 = pneg %p66
      // Predicated region
      $region33: #{tpu_custom_call.1} parent=20 // pred_check
        _
      $region34: #{tpu_custom_call.1} parent=20 // pred_check_branch
        %69 = sbr.rel (%p66) target = $region36
      $region35: #{tpu_custom_call.1} parent=20 // pred_region
        %s70 = sand.u32 1, 7
        %s71 = ssub.s32 1, %s70
        %s72 = scalar_lea.vmem %s41, %s71
        %s73 = ssub.s32 1, %s70
        %s74 = scalar_lea.vmem %s43, %s73 [#allocation2]
        %s75 = sshll.u32 1, %s70
        %s76 = ssub.s32 %s75, 1
        loop: start=0, step=1, limit=1
        $region37: #{tpu_custom_call.1} parent=35 // loop_pre_header
          _
        $region38: #{tpu_custom_call.1} parent=35 // loop_header
          %s78 = sphi 0, %s82
          %p79 = scmp.ge.s32.totalorder %s78, 1
          %s83 = sphi %s72, %s72
          %s84 = sphi %s74, %s74
        $region39: #{tpu_custom_call.1} parent=35 // loop_header_branch
          %81 = sbr.rel (%p79) target = $region43
        $region40: #{tpu_custom_call.1} parent=35 // loop_body
          %v85 = vld [vmem:[%s83] sm:%s76]
          %86 = vst [vmem:[%s84] sm:%s76] %v85
        $region41: #{tpu_custom_call.1} parent=35 // loop_footer
          %s82 = sadd.s32 1, %s78
        $region42: #{tpu_custom_call.1} parent=35 // loop_footer_branch
          %77 = sbr.rel target = $region38
        $region43: #{tpu_custom_call.1} parent=35 // loop_exit
          _
      $region36: #{tpu_custom_call.1} parent=20 // pred_fallthru
        _
    $region21: #{tpu_custom_call.1} parent=1 // pred_fallthru
      _
    // Predicated region
    $region22: #{tpu_custom_call.1} parent=1 // pred_check
      %p50 = pneg %p46
    $region23: #{tpu_custom_call.1} parent=1 // pred_check_branch
      %52 = sbr.rel (%p50) target = $region25
    $region24: #{tpu_custom_call.1} parent=1 // pred_region
      %s53 = sshll.u32 1, 1
      %s54 = ssub.s32 %s53, 1
      loop: start=0, step=1, limit=1
      $region26: #{tpu_custom_call.1} parent=24 // loop_pre_header
        _
      $region27: #{tpu_custom_call.1} parent=24 // loop_header
        %s56 = sphi 0, %s60
        %p57 = scmp.ge.s32.totalorder %s56, 1
        %s61 = sphi %s41, %s41
        %s62 = sphi %s43, %s43
      $region28: #{tpu_custom_call.1} parent=24 // loop_header_branch
        %59 = sbr.rel (%p57) target = $region32
      $region29: #{tpu_custom_call.1} parent=24 // loop_body
        %v63 = vld [vmem:[%s61] sm:%s54]
        %64 = vst [vmem:[%s62] sm:%s54] %v63
      $region30: #{tpu_custom_call.1} parent=24 // loop_footer
        %s60 = sadd.s32 1, %s56
      $region31: #{tpu_custom_call.1} parent=24 // loop_footer_branch
        %55 = sbr.rel target = $region27
      $region32: #{tpu_custom_call.1} parent=24 // loop_exit
        _
    $region25: #{tpu_custom_call.1} parent=1 // pred_fallthru
      _
    // Predicated region
    $region44: #{tpu_custom_call.1} parent=1 // pred_check
      _
    $region45: #{tpu_custom_call.1} parent=1 // pred_check_branch
      %89 = sbr.rel (0) target = $region47
    $region46: #{tpu_custom_call.1} parent=1 // pred_region
      %90 = vsyncadd %s44, 16
    $region47: #{tpu_custom_call.1} parent=1 // pred_fallthru
      _
    %s91 = sadd.s32 %s39, 1
    %s92 = sld [smem:[#allocation5 + %s91]]
    %s93 = scalar_lea.vmem %s1, %s92
    %s94 = sadd.s32 1, %s42
    %s95 = scalar_lea.vmem [#allocation2], %s94
    %p97 = scmp.lt.u32.totalorder 1, 8
    %p98 = pneg %p97
    // Predicated region
    $region48: #{tpu_custom_call.1} parent=1 // pred_check
      _
    $region49: #{tpu_custom_call.1} parent=1 // pred_check_branch
      %100 = sbr.rel (%p97) target = $region51
    $region50: #{tpu_custom_call.1} parent=1 // pred_region
      %s116 = sand.u32 1, 7
      %p117 = scmp.eq.s32.totalorder %s116, 0
      %p118 = pneg %p117
      // Predicated region
      $region63: #{tpu_custom_call.1} parent=50 // pred_check
        _
      $region64: #{tpu_custom_call.1} parent=50 // pred_check_branch
        %120 = sbr.rel (%p117) target = $region66
      $region65: #{tpu_custom_call.1} parent=50 // pred_region
        %s121 = sand.u32 1, 7
        %s122 = ssub.s32 1, %s121
        %s123 = scalar_lea.vmem %s93, %s122
        %s124 = ssub.s32 1, %s121
        %s125 = scalar_lea.vmem %s95, %s124 [#allocation2]
        %s126 = sshll.u32 1, %s121
        %s127 = ssub.s32 %s126, 1
        loop: start=0, step=1, limit=1
        $region67: #{tpu_custom_call.1} parent=65 // loop_pre_header
          _
        $region68: #{tpu_custom_call.1} parent=65 // loop_header
          %s129 = sphi 0, %s133
          %p130 = scmp.ge.s32.totalorder %s129, 1
          %s134 = sphi %s123, %s123
          %s135 = sphi %s125, %s125
        $region69: #{tpu_custom_call.1} parent=65 // loop_header_branch
          %132 = sbr.rel (%p130) target = $region73
        $region70: #{tpu_custom_call.1} parent=65 // loop_body
          %v136 = vld [vmem:[%s134] sm:%s127]
          %137 = vst [vmem:[%s135] sm:%s127] %v136
        $region71: #{tpu_custom_call.1} parent=65 // loop_footer
          %s133 = sadd.s32 1, %s129
        $region72: #{tpu_custom_call.1} parent=65 // loop_footer_branch
          %128 = sbr.rel target = $region68
        $region73: #{tpu_custom_call.1} parent=65 // loop_exit
          _
      $region66: #{tpu_custom_call.1} parent=50 // pred_fallthru
        _
    $region51: #{tpu_custom_call.1} parent=1 // pred_fallthru
      _
    // Predicated region
    $region52: #{tpu_custom_call.1} parent=1 // pred_check
      %p101 = pneg %p97
    $region53: #{tpu_custom_call.1} parent=1 // pred_check_branch
      %103 = sbr.rel (%p101) target = $region55
    $region54: #{tpu_custom_call.1} parent=1 // pred_region
      %s104 = sshll.u32 1, 1
      %s105 = ssub.s32 %s104, 1
      loop: start=0, step=1, limit=1
      $region56: #{tpu_custom_call.1} parent=54 // loop_pre_header
        _
      $region57: #{tpu_custom_call.1} parent=54 // loop_header
        %s107 = sphi 0, %s111
        %p108 = scmp.ge.s32.totalorder %s107, 1
        %s112 = sphi %s93, %s93
        %s113 = sphi %s95, %s95
      $region58: #{tpu_custom_call.1} parent=54 // loop_header_branch
        %110 = sbr.rel (%p108) target = $region62
      $region59: #{tpu_custom_call.1} parent=54 // loop_body
        %v114 = vld [vmem:[%s112] sm:%s105]
        %115 = vst [vmem:[%s113] sm:%s105] %v114
      $region60: #{tpu_custom_call.1} parent=54 // loop_footer
        %s111 = sadd.s32 1, %s107
      $region61: #{tpu_custom_call.1} parent=54 // loop_footer_branch
        %106 = sbr.rel target = $region57
      $region62: #{tpu_custom_call.1} parent=54 // loop_exit
        _
    $region55: #{tpu_custom_call.1} parent=1 // pred_fallthru
      _
    // Predicated region
    $region74: #{tpu_custom_call.1} parent=1 // pred_check
      _
    $region75: #{tpu_custom_call.1} parent=1 // pred_check_branch
      %140 = sbr.rel (0) target = $region77
    $region76: #{tpu_custom_call.1} parent=1 // pred_region
      %141 = vsyncadd %s44, 16
    $region77: #{tpu_custom_call.1} parent=1 // pred_fallthru
      _
    %s142 = sadd.s32 %s39, 2
    %s143 = sld [smem:[#allocation5 + %s142]]
    %s144 = scalar_lea.vmem %s1, %s143
    %s145 = sadd.s32 2, %s42
    %s146 = scalar_lea.vmem [#allocation2], %s145
    %p148 = scmp.lt.u32.totalorder 1, 8
    %p149 = pneg %p148
    // Predicated region
    $region78: #{tpu_custom_call.1} parent=1 // pred_check
      _
    $region79: #{tpu_custom_call.1} parent=1 // pred_check_branch
      %151 = sbr.rel (%p148) target = $region81
    $region80: #{tpu_custom_call.1} parent=1 // pred_region
      %s167 = sand.u32 1, 7
      %p168 = scmp.eq.s32.totalorder %s167, 0
      %p169 = pneg %p168
      // Predicated region
      $region93: #{tpu_custom_call.1} parent=80 // pred_check
        _
      $region94: #{tpu_custom_call.1} parent=80 // pred_check_branch
        %171 = sbr.rel (%p168) target = $region96
      $region95: #{tpu_custom_call.1} parent=80 // pred_region
        %s172 = sand.u32 1, 7
        %s173 = ssub.s32 1, %s172
        %s174 = scalar_lea.vmem %s144, %s173
        %s175 = ssub.s32 1, %s172
        %s176 = scalar_lea.vmem %s146, %s175 [#allocation2]
        %s177 = sshll.u32 1, %s172
        %s178 = ssub.s32 %s177, 1
        loop: start=0, step=1, limit=1
        $region97: #{tpu_custom_call.1} parent=95 // loop_pre_header
          _
        $region98: #{tpu_custom_call.1} parent=95 // loop_header
          %s180 = sphi 0, %s184
          %p181 = scmp.ge.s32.totalorder %s180, 1
          %s185 = sphi %s174, %s174
          %s186 = sphi %s176, %s176
        $region99: #{tpu_custom_call.1} parent=95 // loop_header_branch
          %183 = sbr.rel (%p181) target = $region103
        $region100: #{tpu_custom_call.1} parent=95 // loop_body
          %v187 = vld [vmem:[%s185] sm:%s178]
          %188 = vst [vmem:[%s186] sm:%s178] %v187
        $region101: #{tpu_custom_call.1} parent=95 // loop_footer
          %s184 = sadd.s32 1, %s180
        $region102: #{tpu_custom_call.1} parent=95 // loop_footer_branch
          %179 = sbr.rel target = $region98
        $region103: #{tpu_custom_call.1} parent=95 // loop_exit
          _
      $region96: #{tpu_custom_call.1} parent=80 // pred_fallthru
        _
    $region81: #{tpu_custom_call.1} parent=1 // pred_fallthru
      _
    // Predicated region
    $region82: #{tpu_custom_call.1} parent=1 // pred_check
      %p152 = pneg %p148
    $region83: #{tpu_custom_call.1} parent=1 // pred_check_branch
      %154 = sbr.rel (%p152) target = $region85
    $region84: #{tpu_custom_call.1} parent=1 // pred_region
      %s155 = sshll.u32 1, 1
      %s156 = ssub.s32 %s155, 1
      loop: start=0, step=1, limit=1
      $region86: #{tpu_custom_call.1} parent=84 // loop_pre_header
        _
      $region87: #{tpu_custom_call.1} parent=84 // loop_header
        %s158 = sphi 0, %s162
        %p159 = scmp.ge.s32.totalorder %s158, 1
        %s163 = sphi %s144, %s144
        %s164 = sphi %s146, %s146
      $region88: #{tpu_custom_call.1} parent=84 // loop_header_branch
        %161 = sbr.rel (%p159) target = $region92
      $region89: #{tpu_custom_call.1} parent=84 // loop_body
        %v165 = vld [vmem:[%s163] sm:%s156]
        %166 = vst [vmem:[%s164] sm:%s156] %v165
      $region90: #{tpu_custom_call.1} parent=84 // loop_footer
        %s162 = sadd.s32 1, %s158
      $region91: #{tpu_custom_call.1} parent=84 // loop_footer_branch
        %157 = sbr.rel target = $region87
      $region92: #{tpu_custom_call.1} parent=84 // loop_exit
        _
    $region85: #{tpu_custom_call.1} parent=1 // pred_fallthru
      _
    // Predicated region
    $region104: #{tpu_custom_call.1} parent=1 // pred_check
      _
    $region105: #{tpu_custom_call.1} parent=1 // pred_check_branch
      %191 = sbr.rel (0) target = $region107
    $region106: #{tpu_custom_call.1} parent=1 // pred_region
      %192 = vsyncadd %s44, 16
    $region107: #{tpu_custom_call.1} parent=1 // pred_fallthru
      _
    %s193 = smul.u32 1, 1
    %s194 = sshll.u32 %s193, 4
    %195 = dma.done %s44, %s194
    %s196 = sshll.u32 %s193, 4
    %197 = dma.done %s44, %s196
    %s198 = sshll.u32 %s193, 4
    %199 = dma.done %s44, %s198
    %v200 = vld [vmem:[%s4] sm:$0xff]
    %vm201 = vcmp.ne.f32.partialorder %v200, 0.0
    %v202 = vld [vmem:[%s43] sm:$0xff]
    %v203 = vsel %vm201, 1, 0
    %204 = vset.pattern.permute.xlu0 0
    %205 = vperm.xlu0 %204, %v203
    %v206 = vpop.permute.xlu0 %205
    %vm207 = vcmp.eq.s32.totalorder %v206, 1
    %v208 = vsel %vm207, %v202, 0.0
    %v209 = vpack.c.bf16 %v208, %v208
    %v210 = vld [vmem:[#allocation6] sm:$0xf]
    %v211 = vld [vmem:[#allocation6 + $0x4] sm:$0xf]
    %v212 = vld [vmem:[#allocation6 + $0x8] sm:$0xf]
    %v213 = vld [vmem:[#allocation6 + $0xc] sm:$0xf]
    %v214 = vld [vmem:[#allocation6 + $0x10] sm:$0xf]
    %v215 = vld [vmem:[#allocation6 + $0x14] sm:$0xf]
    %v216 = vld [vmem:[#allocation6 + $0x18] sm:$0xf]
    %v217 = vld [vmem:[#allocation6 + $0x1c] sm:$0xf]
    %v218 = vld [vmem:[#allocation6 + $0x20] sm:$0xf]
    %v219 = vld [vmem:[#allocation6 + $0x24] sm:$0xf]
    %v220 = vld [vmem:[#allocation6 + $0x28] sm:$0xf]
    %v221 = vld [vmem:[#allocation6 + $0x2c] sm:$0xf]
    %v222 = vld [vmem:[#allocation6 + $0x30] sm:$0xf]
    %v223 = vld [vmem:[#allocation6 + $0x34] sm:$0xf]
    %v224 = vld [vmem:[#allocation6 + $0x38] sm:$0xf]
    %v225 = vld [vmem:[#allocation6 + $0x3c] sm:$0xf]
    %v226 = vld [vmem:[%s3] sm:$0x1]
    %v228 = vlaneseq
    %v229 = vshrl.u32 %v228, 7
    %v230 = vsub.s32 0, %v229
    %v231 = vrot.slane %v226, %v230
    %v249 = vunpack.c.l.b16 %v210
    %v250 = vunpack.c.l.b16 %v211
    %v251 = vunpack.c.l.b16 %v212
    %v252 = vunpack.c.l.b16 %v213
    %v253 = vunpack.c.l.b16 %v214
    %v254 = vunpack.c.l.b16 %v215
    %v255 = vunpack.c.l.b16 %v216
    %v256 = vunpack.c.l.b16 %v217
    %v257 = vunpack.c.l.b16 %v218
    %v258 = vunpack.c.l.b16 %v219
    %v259 = vunpack.c.l.b16 %v220
    %v260 = vunpack.c.l.b16 %v221
    %v261 = vunpack.c.l.b16 %v222
    %v262 = vunpack.c.l.b16 %v223
    %v263 = vunpack.c.l.b16 %v224
    %v264 = vunpack.c.l.b16 %v225
    %v265 = vpack.c.b16 %v250, %v249
    %v266 = vpack.c.b16 %v252, %v251
    %v267 = vpack.c.b16 %v254, %v253
    %v268 = vpack.c.b16 %v256, %v255
    %v269 = vpack.c.b16 %v258, %v257
    %v270 = vpack.c.b16 %v260, %v259
    %v271 = vpack.c.b16 %v262, %v261
    %v272 = vpack.c.b16 %v264, %v263
    %281 = vmatprep.subr.bf16.mxu0 0
    %282 = vmatpush1.bf16.msra.mxu0 %v272
    %283 = vmatprep.subr.bf16.mxu0 0
    %284 = vmatpush1.bf16.msra.mxu0 %v271
    %285 = vmatprep.subr.bf16.mxu0 0
    %286 = vmatpush1.bf16.msra.mxu0 %v270
    %287 = vmatprep.subr.bf16.mxu0 0
    %288 = vmatpush1.bf16.msra.mxu0 %v269
    %289 = vmatprep.subr.bf16.mxu0 0
    %290 = vmatpush1.bf16.msra.mxu0 %v268
    %291 = vmatprep.subr.bf16.mxu0 0
    %292 = vmatpush1.bf16.msra.mxu0 %v267
    %293 = vmatprep.subr.bf16.mxu0 0
    %294 = vmatpush1.bf16.msra.mxu0 %v266
    %295 = vmatprep.subr.bf16.mxu0 0
    %296 = vmatpush1.bf16.msra.mxu0 %v265
    %297 = vmatprep.subr.bf16.mxu0 0
    %298 = vmatpush2.bf16.msra.mxu0 0
    %299 = vmatprep.subr.bf16.mxu0 0
    %300 = vmatpush2.bf16.msra.mxu0 0
    %301 = vmatprep.subr.bf16.mxu0 0
    %302 = vmatpush2.bf16.msra.mxu0 0
    %303 = vmatprep.subr.bf16.mxu0 0
    %304 = vmatpush2.bf16.msra.mxu0 0
    %305 = vmatprep.subr.bf16.mxu0 0
    %306 = vmatpush2.bf16.msra.mxu0 0
    %307 = vmatprep.subr.bf16.mxu0 0
    %308 = vmatpush2.bf16.msra.mxu0 0
    %309 = vmatprep.subr.bf16.mxu0 0
    %310 = vmatpush2.bf16.msra.mxu0 0
    %311 = vmatprep.subr.bf16.mxu0 0
    %312 = vmatpush2.bf16.msra.mxu0 0
    %313 = vmatprep.mubr.bf16.mxu0 0
    %314 = vmatmul.mubr.bf16.gmra.mxu0 %v209
    %v315 = vpop.f32.mrf.mxu0
    %v316 = vadd.f32 %v231, %v315
    %v317 = vpop.f32.mrf.mxu0
    %v318 = vpop.f32.mrf.mxu0
    %v319 = vpop.f32.mrf.mxu0
    %320 = vdwg.mxu0
    %321 = vst [vmem:[#allocation9] sm:$0xff] %v316
    // Predicated region
    $region108: #{tpu_custom_call.1} parent=1 // pred_check
      _
    $region109: #{tpu_custom_call.1} parent=1 // pred_check_branch
      %323 = sbr.rel (0) target = $region111
    $region110: #{tpu_custom_call.1} parent=1 // pred_region
      %s325 = ssub.s32 128, 128
      %326 = vsyncadd [#allocation8], %s325
      %s328 = sshll.u32 [#allocation9], 4
      %s329 = int_to_ptr.vmem [resolvable:$true] %s328
      %331 = dma.vmem_to_hbm [thread:$0]  %s329, 128, %s5, [#allocation8]
    $region111: #{tpu_custom_call.1} parent=1 // pred_fallthru
      _
    // Predicated region
    $region112: #{tpu_custom_call.1} parent=1 // pred_check
      _
    $region113: #{tpu_custom_call.1} parent=1 // pred_check_branch
      %333 = sbr.rel (0) target = $region115
    $region114: #{tpu_custom_call.1} parent=1 // pred_region
      %334 = dma.done [#allocation8], 128
    $region115: #{tpu_custom_call.1} parent=1 // pred_fallthru
      _
    %335 = vsyncpa [#allocation7], 1
    %336 = vsyncpa [#allocation8], 1
  %337 = vsyncmov [#allocation3]
  %s338 = vpop.sfrf %337
  %p339 = scmp.eq.s32.totalorder %s338, 0
  %p340 = pneg %p339
  %342 = shalt.err (%p340)
  %s343 = scalar_lea.sflag [#allocation3], 1
  %344 = vsyncmov %s343
  %s345 = vpop.sfrf %344
  %p346 = scmp.eq.s32.totalorder %s345, 0
  %p347 = pneg %p346
  %349 = shalt.err (%p347)

</llo_original>
